<compile_context>
chip_gen: v5e
topology: v5e:2x2
jax: 0.10.0
libtpu: 0.0.40
codegen_flags: <defaults>
</compile_context>

<pallas_src>
import math

import jax
import jax.numpy as jnp
from jax.experimental import pallas as pl
from jax.experimental.pallas import tpu as pltpu


# ---------------------------------------------------------------------------
# Kernel
# ---------------------------------------------------------------------------
def _make_spdconv_kernel(Wo: int, thw: int, cin_p: int, cout: int):
    """Closure over static shapes (output width, spatial tile, padded Cin, Cout)."""
    hw_roll = (thw % 128 == 0)          # pltpu.roll on lane-aligned tiles only

    def kernel(x_ref, h_ref, w_ref, b_ref, m_ref, o_ref):
        # x_ref: (1, Cin_p, thw)       bf16  body tile (lane aligned, non-overlapping)
        # h_ref: (1, 1, 2*Cin_p, Wo)   bf16  [:Cin_p] = row above tile, [Cin_p:] = row below
        # w_ref: (3, 3*Cout, Cin_p)    bf16  w_ref[dy, dx*Cout + co, ci]  (BN scale folded)
        # b_ref: (Cout, 1)             f32   folded BN bias
        # m_ref: (2, thw)              f32   [0]: w>=1 valid (left tap), [1]: w<=Wo-2 valid
        # o_ref: (1, Cout, thw)        f32
        body = x_ref[0, :, :]                          # (Cin_p, thw)
        halo = h_ref[0, 0, :, :]                       # (2*Cin_p, Wo)
        row_up = halo[:cin_p, :]                       # image row just above the tile
        row_dn = halo[cin_p:, :]                       # image row just below the tile

        if thw == Wo:                                  # one output row per tile
            up, dn = row_up, row_dn
        else:
            up = jnp.concatenate([row_up, body[:, :thw - Wo]], axis=1)   # shifted +1 row
            dn = jnp.concatenate([body[:, Wo:], row_dn], axis=1)         # shifted -1 row

        # Three MXU matmuls (K = Cin_p), f32 accumulation.  Rows of `acc` are
        # grouped by dx: [0:Cout]=dx0 (left), [Cout:2Cout]=dx1 (center), [2Cout:]=dx2.
        acc = jnp.dot(w_ref[1, :, :], body, preferred_element_type=jnp.float32)
        acc = acc + jnp.dot(w_ref[0, :, :], up, preferred_element_type=jnp.float32)
        acc = acc + jnp.dot(w_ref[2, :, :], dn, preferred_element_type=jnp.float32)

        center = acc[cout:2 * cout, :]
        left = acc[:cout, :]
        right = acc[2 * cout:, :]
        if hw_roll:
            left = pltpu.roll(left, shift=1, axis=1)           # value at w-1
            right = pltpu.roll(right, shift=thw - 1, axis=1)   # value at w+1
        else:                                                  # tiny non-128-lane tiles
            left = jnp.roll(left, 1, axis=1)
            right = jnp.roll(right, -1, axis=1)

        y = center + left * m_ref[0:1, :] + right * m_ref[1:2, :] + b_ref[...]
        o_ref[0, :, :] = y * jax.nn.sigmoid(y)                 # SiLU
        # TODO(synk): emit bf16 here when the downstream consumer accepts it
        # (halves output HBM writes on v6e/v7x); kept f32 to match the module.

    return kernel


# ---------------------------------------------------------------------------
# Tile sizing (VMEM-capped, lane-dense)
# ---------------------------------------------------------------------------
def _vmem_bytes(cin_p: int, cout: int, wo: int, thw: int) -> int:
    """Conservative per-grid-step VMEM estimate (double-buffered I/O + temps)."""
    body = 2 * cin_p * thw * 2          # input block, double buffered, bf16
    halo = 2 * 2 * cin_p * wo * 2
    wts = 3 * 3 * cout * cin_p * 2
    out = 2 * cout * thw * 4            # output block, double buffered, f32
    acc = 3 * cout * thw * 4            # accumulator
    tmp = 2 * cin_p * thw * 2           # up / dn shifted-row operands
    post = 3 * cout * thw * 4           # rolled / masked partials + y
    misc = 2 * thw * 4 + 4 * cout + (1 << 16)
    return body + halo + wts + out + acc + tmp + post + misc


def _choose_rows_per_tile(Ho, Wo, cin_p, cout, N, *,
                          target_lanes=4096, vmem_cap=16 << 20):
    """Rows-per-tile `rpt` (tile = rpt*Wo lanes) and a possibly padded Ho.

    Constraints: rpt*Wo % 128 == 0 when tiling (BlockSpec (8,128) rule), tiles
    are whole output rows (keeps roll/mask/halo logic valid), conservative
    VMEM estimate under `vmem_cap` (keeps v7x's 64 MiB VMEM safe).
    """
    def fits(r):
        return _vmem_bytes(cin_p, cout, Wo, r * Wo) <= vmem_cap

    cands = [r for r in range(1, Ho + 1)
             if Ho % r == 0 and (r * Wo) % 128 == 0 and fits(r)]
    if N == 1:
        # Prefer >= 2 spatial tiles so both v7x TensorCores get work.
        multi = [r for r in cands if r < Ho]
        cands = multi or cands
    if cands:
        big = [r for r in cands if r * Wo >= target_lanes]
        return (min(big) if big else max(cands)), Ho
    if fits(Ho):
        return Ho, Ho                   # whole image as one tile (small inputs)
    # No divisor of Ho is lane-aligned and the whole image busts the cap: pad
    # Ho with zero rows (the wrapper slices the padded output rows back off).
    r0 = 128 // math.gcd(Wo, 128)
    rpt = r0
    while (rpt + r0) * Wo <= target_lanes and fits(rpt + r0):
        rpt += r0
    Ho_p = -(-Ho // rpt) * rpt
    return rpt, Ho_p


# ---------------------------------------------------------------------------
# Wrapper
# ---------------------------------------------------------------------------
@jax.jit
def spdconv_pallas(x_nchw, weight, gamma, beta, run_mean, run_var, eps=1e-3):
    """SPDConv forward: space-to-depth + Conv(k=3,s=1,p=1, no bias) + BN(eval) + SiLU.

    x_nchw: (N, C, H, W) f32 with H, W even.  weight: (Cout, 4*C, 3, 3) f32.
    NOTE: ultralytics' Conv uses BatchNorm2d(eps=1e-3, momentum=0.03); raw
    nn.BatchNorm2d defaults to eps=1e-5 — pass eps explicitly if needed.
    """
    N, C, H, W = x_nchw.shape
    assert H % 2 == 0 and W % 2 == 0, "SPDConv needs even H and W"
    Cout = weight.shape[0]
    Cin = 4 * C
    assert weight.shape == (Cout, Cin, 3, 3)
    Ho, Wo = H // 2, W // 2

    # --- space-to-depth (same channel order as torch.cat), channels-first ---
    x_spd = jnp.concatenate(
        [x_nchw[..., ::2, ::2], x_nchw[..., 1::2, ::2],
         x_nchw[..., ::2, 1::2], x_nchw[..., 1::2, 1::2]], axis=1)   # (N,Cin,Ho,Wo)

    # --- pad Cin to a multiple of 16 (bf16 sublane packing alignment) ---
    Cin_p = -(-Cin // 16) * 16
    if Cin_p != Cin:
        x_spd = jnp.pad(x_spd, ((0, 0), (0, Cin_p - Cin), (0, 0), (0, 0)))

    # --- spatial tiling over whole output rows, VMEM-capped ---
    rpt, Ho_p = _choose_rows_per_tile(Ho, Wo, Cin_p, Cout, N)
    if Ho_p != Ho:
        x_spd = jnp.pad(x_spd, ((0, 0), (0, 0), (0, Ho_p - Ho), (0, 0)))
    n_t = Ho_p // rpt
    thw = rpt * Wo
    HWp = Ho_p * Wo

    xb = x_spd.astype(jnp.bfloat16)                     # (N, Cin_p, Ho_p, Wo)
    x_flat = xb.reshape(N, Cin_p, HWp)                  # body input (no halo duplication)

    # --- per-tile one-row halos (row above / below each tile; zeros at edges) ---
    last_rows = xb[:, :, rpt - 1::rpt, :]               # (N, Cin_p, n_t, Wo)
    zrow = jnp.zeros_like(last_rows[:, :, :1, :])
    prev = jnp.concatenate([zrow, last_rows[:, :, : n_t - 1, :]], axis=2)
    nxt = jnp.concatenate([xb[:, :, rpt::rpt, :], zrow], axis=2)
    halo = jnp.concatenate([prev, nxt], axis=1)         # (N, 2*Cin_p, n_t, Wo)
    halo = jnp.transpose(halo, (0, 2, 1, 3))            # (N, n_t, 2*Cin_p, Wo)

    # --- fold eval-mode BatchNorm: scale into the weights, bias separate ---
    scale = gamma / jnp.sqrt(run_var + eps)                             # (Cout,)
    bias = (beta - run_mean * scale).reshape(Cout, 1).astype(jnp.float32)
    w2 = weight * scale[:, None, None, None]                            # (Cout,Cin,3,3)
    w2 = jnp.transpose(w2, (2, 3, 0, 1)).reshape(3, 3 * Cout, Cin)      # [dy, dx*Cout+co, ci]
    if Cin_p != Cin:
        w2 = jnp.pad(w2, ((0, 0), (0, 0), (0, Cin_p - Cin)))
    w2 = w2.astype(jnp.bfloat16)

    # --- boundary-column masks for the rolled dx=0 / dx=2 partial outputs ---
    w_idx = jnp.arange(thw, dtype=jnp.int32) % Wo                       # thw % Wo == 0
    masks = jnp.stack([w_idx >= 1, w_idx <= Wo - 2]).astype(jnp.float32)  # (2, thw)

    est = _vmem_bytes(Cin_p, Cout, Wo, thw)
    vmem_limit = int(min(max(32 << 20, 2 * est), 64 << 20))

    kernel = _make_spdconv_kernel(Wo, thw, Cin_p, Cout)
    out_flat = pl.pallas_call(
        kernel,
        out_shape=jax.ShapeDtypeStruct((N, Cout, HWp), jnp.float32),
        grid_spec=pltpu.PrefetchScalarGridSpec(
            num_scalar_prefetch=0,
            grid=(N, n_t),
            in_specs=[
                pl.BlockSpec((1, Cin_p, thw), lambda b, j: (b, 0, j)),
                pl.BlockSpec((1, 1, 2 * Cin_p, Wo), lambda b, j: (b, j, 0, 0)),
                pl.BlockSpec((3, 3 * Cout, Cin_p), lambda b, j: (0, 0, 0)),
                pl.BlockSpec((Cout, 1), lambda b, j: (0, 0)),
                pl.BlockSpec((2, thw), lambda b, j: (0, 0)),
            ],
            out_specs=pl.BlockSpec((1, Cout, thw), lambda b, j: (b, 0, j)),
        ),
        compiler_params=pltpu.CompilerParams(
            dimension_semantics=("parallel", "parallel"),
            vmem_limit_bytes=vmem_limit),
    )(x_flat, halo, w2, bias, masks)

    out = out_flat.reshape(N, Cout, Ho_p, Wo)           # already NCHW; reshape is free
    if Ho_p != Ho:
        out = out[:, :, :Ho, :]
    return out


# ---------------------------------------------------------------------------
# Plain-JAX reference (same bf16 input/weight quantization as the kernel)
# ---------------------------------------------------------------------------
def spdconv_reference(x_nchw, weight, gamma, beta, run_mean, run_var, eps=1e-3):
    x_spd = jnp.concatenate(
        [x_nchw[..., ::2, ::2], x_nchw[..., 1::2, ::2],
         x_nchw[..., ::2, 1::2], x_nchw[..., 1::2, 1::2]], axis=1)
    scale = gamma / jnp.sqrt(run_var + eps)
    bias = beta - run_mean * scale
    xq = x_spd.astype(jnp.bfloat16).astype(jnp.float32)
    wq = (weight * scale[:, None, None, None]).astype(jnp.bfloat16).astype(jnp.float32)
    y = jax.lax.conv_general_dilated(
        xq, wq, window_strides=(1, 1), padding=((1, 1), (1, 1)),
        dimension_numbers=("NCHW", "OIHW", "NCHW"),
        precision=jax.lax.Precision.HIGHEST)
    y = y + bias.reshape(1, -1, 1, 1)
    return y * jax.nn.sigmoid(y)


if __name__ == "__main__":
    key = jax.random.PRNGKey(0)
    N, C, H, W = 2, 4, 16, 16
    inc, ouc = C, 8
    Cin = inc * 4

    k_x, k_w, k_g, k_b, k_m, k_v = jax.random.split(key, 6)
    x = jax.random.normal(k_x, (N, C, H, W), dtype=jnp.float32)
    # Conv(inc*4, ouc, k=3): weight (ouc, inc*4, 3, 3), no conv bias.
    weight = 0.1 * jax.random.normal(k_w, (ouc, Cin, 3, 3), dtype=jnp.float32)
    # Deterministic BatchNorm2d(ouc) params / running stats (eval semantics).
    gamma = 1.0 + 0.1 * jax.random.normal(k_g, (ouc,), dtype=jnp.float32)
    beta = 0.1 * jax.random.normal(k_b, (ouc,), dtype=jnp.float32)
    run_mean = 0.1 * jax.random.normal(k_m, (ouc,), dtype=jnp.float32)
    run_var = jnp.abs(1.0 + 0.1 * jax.random.normal(k_v, (ouc,), dtype=jnp.float32))

    out = spdconv_pallas(x, weight, gamma, beta, run_mean, run_var)
    out = jax.block_until_ready(out)

    ref = spdconv_reference(x, weight, gamma, beta, run_mean, run_var)
    assert out.shape == (N, ouc, H // 2, W // 2)
    err = float(jnp.max(jnp.abs(out - ref)))
    assert jnp.allclose(out, ref, atol=2e-3, rtol=2e-3), err

    print("KERNEL_OK")
</pallas_src>

<mosaic_0001>
module attributes {stable_mosaic.version = 11 : i64} {
  func.func @kernel(%arg0: i32, %arg1: i32, %arg2: memref<1x16x64xbf16, #tpu.memory_space<vmem>>, %arg3: memref<1x1x32x8xbf16, #tpu.memory_space<vmem>>, %arg4: memref<3x24x16xbf16, #tpu.memory_space<vmem>>, %arg5: memref<8x1xf32, #tpu.memory_space<vmem>>, %arg6: memref<2x64xf32, #tpu.memory_space<vmem>>, %arg7: memref<1x8x64xf32, #tpu.memory_space<vmem>>) attributes {dimension_semantics = [#tpu.dimension_semantics<parallel>, #tpu.dimension_semantics<parallel>], iteration_bounds = array<i64: 2, 1>, scalar_prefetch = 0 : i64, scratch_operands = 0 : i64, tpu.core_type = #tpu.core_type<tc>, window_params = [{transform_indices = @transform_0, window_bounds = array<i64: 1, 16, 64>}, {transform_indices = @transform_1, window_bounds = array<i64: 1, 1, 32, 8>}, {pipeline_mode = #tpu.pipeline_mode<synchronous>, transform_indices = @transform_2, window_bounds = array<i64: 3, 24, 16>}, {pipeline_mode = #tpu.pipeline_mode<synchronous>, transform_indices = @transform_3, window_bounds = array<i64: 8, 1>}, {pipeline_mode = #tpu.pipeline_mode<synchronous>, transform_indices = @transform_4, window_bounds = array<i64: 2, 64>}, {transform_indices = @transform_5, window_bounds = array<i64: 1, 8, 64>}]} {
    %c0 = arith.constant 0 : index
    %c0_0 = arith.constant 0 : index
    %c0_1 = arith.constant 0 : index
    %0 = vector.load %arg2[%c0, %c0_0, %c0_1] : memref<1x16x64xbf16, #tpu.memory_space<vmem>>, vector<1x16x64xbf16>
    %1 = vector.shape_cast %0 : vector<1x16x64xbf16> to vector<16x64xbf16>
    %c0_2 = arith.constant 0 : index
    %c0_3 = arith.constant 0 : index
    %c0_4 = arith.constant 0 : index
    %c0_5 = arith.constant 0 : index
    %2 = vector.load %arg3[%c0_2, %c0_3, %c0_4, %c0_5] : memref<1x1x32x8xbf16, #tpu.memory_space<vmem>>, vector<1x1x32x8xbf16>
    %3 = vector.shape_cast %2 : vector<1x1x32x8xbf16> to vector<32x8xbf16>
    %4 = vector.extract_strided_slice %3 {offsets = [0, 0], sizes = [16, 8], strides = [1, 1]} : vector<32x8xbf16> to vector<16x8xbf16>
    %5 = vector.extract_strided_slice %3 {offsets = [16, 0], sizes = [16, 8], strides = [1, 1]} : vector<32x8xbf16> to vector<16x8xbf16>
    %6 = vector.extract_strided_slice %1 {offsets = [0, 0], sizes = [16, 56], strides = [1, 1]} : vector<16x64xbf16> to vector<16x56xbf16>
    %7 = tpu.concatenate %4, %6 in 1 : vector<16x8xbf16>, vector<16x56xbf16> -> vector<16x64xbf16>
    %8 = vector.extract_strided_slice %1 {offsets = [0, 8], sizes = [16, 56], strides = [1, 1]} : vector<16x64xbf16> to vector<16x56xbf16>
    %9 = tpu.concatenate %8, %5 in 1 : vector<16x56xbf16>, vector<16x8xbf16> -> vector<16x64xbf16>
    %c1 = arith.constant 1 : index
    %c0_6 = arith.constant 0 : index
    %c0_7 = arith.constant 0 : index
    %10 = vector.load %arg4[%c1, %c0_6, %c0_7] : memref<3x24x16xbf16, #tpu.memory_space<vmem>>, vector<1x24x16xbf16>
    %11 = vector.shape_cast %10 : vector<1x24x16xbf16> to vector<24x16xbf16>
    %cst = arith.constant dense<0.000000e+00> : vector<24x64xf32>
    %12 = tpu.matmul %11, %1, %cst {dimension_numbers = #tpu.dot_dimension_numbers<[1], [0], [0], [1], [0, 0, 1, 1], [], []>} : vector<24x16xbf16>, vector<16x64xbf16>, vector<24x64xf32> -> vector<24x64xf32>
    %c0_8 = arith.constant 0 : index
    %c0_9 = arith.constant 0 : index
    %c0_10 = arith.constant 0 : index
    %13 = vector.load %arg4[%c0_8, %c0_9, %c0_10] : memref<3x24x16xbf16, #tpu.memory_space<vmem>>, vector<1x24x16xbf16>
    %14 = vector.shape_cast %13 : vector<1x24x16xbf16> to vector<24x16xbf16>
    %cst_11 = arith.constant dense<0.000000e+00> : vector<24x64xf32>
    %15 = tpu.matmul %14, %7, %cst_11 {dimension_numbers = #tpu.dot_dimension_numbers<[1], [0], [0], [1], [0, 0, 1, 1], [], []>} : vector<24x16xbf16>, vector<16x64xbf16>, vector<24x64xf32> -> vector<24x64xf32>
    %16 = arith.addf %12, %15 : vector<24x64xf32>
    %c2 = arith.constant 2 : index
    %c0_12 = arith.constant 0 : index
    %c0_13 = arith.constant 0 : index
    %17 = vector.load %arg4[%c2, %c0_12, %c0_13] : memref<3x24x16xbf16, #tpu.memory_space<vmem>>, vector<1x24x16xbf16>
    %18 = vector.shape_cast %17 : vector<1x24x16xbf16> to vector<24x16xbf16>
    %cst_14 = arith.constant dense<0.000000e+00> : vector<24x64xf32>
    %19 = tpu.matmul %18, %9, %cst_14 {dimension_numbers = #tpu.dot_dimension_numbers<[1], [0], [0], [1], [0, 0, 1, 1], [], []>} : vector<24x16xbf16>, vector<16x64xbf16>, vector<24x64xf32> -> vector<24x64xf32>
    %20 = arith.addf %16, %19 : vector<24x64xf32>
    %21 = vector.extract_strided_slice %20 {offsets = [8, 0], sizes = [8, 64], strides = [1, 1]} : vector<24x64xf32> to vector<8x64xf32>
    %22 = vector.extract_strided_slice %20 {offsets = [0, 0], sizes = [8, 64], strides = [1, 1]} : vector<24x64xf32> to vector<8x64xf32>
    %23 = vector.extract_strided_slice %20 {offsets = [16, 0], sizes = [8, 64], strides = [1, 1]} : vector<24x64xf32> to vector<8x64xf32>
    %24 = vector.extract_strided_slice %22 {offsets = [0, 63], sizes = [8, 1], strides = [1, 1]} : vector<8x64xf32> to vector<8x1xf32>
    %25 = vector.extract_strided_slice %22 {offsets = [0, 0], sizes = [8, 63], strides = [1, 1]} : vector<8x64xf32> to vector<8x63xf32>
    %26 = tpu.concatenate %24, %25 in 1 : vector<8x1xf32>, vector<8x63xf32> -> vector<8x64xf32>
    %27 = vector.extract_strided_slice %23 {offsets = [0, 1], sizes = [8, 63], strides = [1, 1]} : vector<8x64xf32> to vector<8x63xf32>
    %28 = vector.extract_strided_slice %23 {offsets = [0, 0], sizes = [8, 1], strides = [1, 1]} : vector<8x64xf32> to vector<8x1xf32>
    %29 = tpu.concatenate %27, %28 in 1 : vector<8x63xf32>, vector<8x1xf32> -> vector<8x64xf32>
    %c0_15 = arith.constant 0 : index
    %c0_16 = arith.constant 0 : index
    %30 = vector.load %arg6[%c0_15, %c0_16] : memref<2x64xf32, #tpu.memory_space<vmem>>, vector<1x64xf32>
    %31 = vector.broadcast %30 : vector<1x64xf32> to vector<8x64xf32>
    %32 = arith.mulf %26, %31 : vector<8x64xf32>
    %33 = arith.addf %21, %32 : vector<8x64xf32>
    %c1_17 = arith.constant 1 : index
    %c0_18 = arith.constant 0 : index
    %34 = vector.load %arg6[%c1_17, %c0_18] : memref<2x64xf32, #tpu.memory_space<vmem>>, vector<1x64xf32>
    %35 = vector.broadcast %34 : vector<1x64xf32> to vector<8x64xf32>
    %36 = arith.mulf %29, %35 : vector<8x64xf32>
    %37 = arith.addf %33, %36 : vector<8x64xf32>
    %c0_19 = arith.constant 0 : index
    %c0_20 = arith.constant 0 : index
    %38 = vector.load %arg5[%c0_19, %c0_20] : memref<8x1xf32, #tpu.memory_space<vmem>>, vector<8x1xf32>
    %39 = vector.broadcast %38 : vector<8x1xf32> to vector<8x64xf32>
    %40 = arith.addf %37, %39 : vector<8x64xf32>
    %41 = arith.negf %40 : vector<8x64xf32>
    %42 = math.exp %41 : vector<8x64xf32>
    %cst_21 = arith.constant 1.000000e+00 : f32
    %43 = vector.broadcast %cst_21 : f32 to vector<8x64xf32>
    %44 = arith.addf %43, %42 : vector<8x64xf32>
    %45 = arith.divf %43, %44 : vector<8x64xf32>
    %46 = arith.mulf %40, %45 : vector<8x64xf32>
    %c0_22 = arith.constant 0 : index
    %c0_23 = arith.constant 0 : index
    %c0_24 = arith.constant 0 : index
    %47 = vector.load %arg7[%c0_22, %c0_23, %c0_24] : memref<1x8x64xf32, #tpu.memory_space<vmem>>, vector<1x8x64xf32>
    %48 = vector.shape_cast %47 : vector<1x8x64xf32> to vector<8x64xf32>
    %49 = vector.shape_cast %46 : vector<8x64xf32> to vector<1x8x64xf32>
    tpu.vector_store %arg7[%c0_22, %c0_23, %c0_24], %49 {strides = array<i32>} : memref<1x8x64xf32, #tpu.memory_space<vmem>>, vector<1x8x64xf32>,
    return
  }
  func.func @transform_0(%arg0: i32, %arg1: i32) -> (i32, i32, i32) {
    %c0_i32 = arith.constant 0 : i32
    %c0_i32_0 = arith.constant 0 : i32
    return %arg0, %c0_i32, %arg1 : i32, i32, i32
  }
  func.func @transform_1(%arg0: i32, %arg1: i32) -> (i32, i32, i32, i32) {
    %c0_i32 = arith.constant 0 : i32
    %c0_i32_0 = arith.constant 0 : i32
    %c0_i32_1 = arith.constant 0 : i32
    return %arg0, %arg1, %c0_i32, %c0_i32_0 : i32, i32, i32, i32
  }
  func.func @transform_2(%arg0: i32, %arg1: i32) -> (i32, i32, i32) {
    %c0_i32 = arith.constant 0 : i32
    %c0_i32_0 = arith.constant 0 : i32
    %c0_i32_1 = arith.constant 0 : i32
    %c0_i32_2 = arith.constant 0 : i32
    return %c0_i32, %c0_i32_0, %c0_i32_1 : i32, i32, i32
  }
  func.func @transform_3(%arg0: i32, %arg1: i32) -> (i32, i32) {
    %c0_i32 = arith.constant 0 : i32
    %c0_i32_0 = arith.constant 0 : i32
    %c0_i32_1 = arith.constant 0 : i32
    return %c0_i32, %c0_i32_0 : i32, i32
  }
  func.func @transform_4(%arg0: i32, %arg1: i32) -> (i32, i32) {
    %c0_i32 = arith.constant 0 : i32
    %c0_i32_0 = arith.constant 0 : i32
    %c0_i32_1 = arith.constant 0 : i32
    return %c0_i32, %c0_i32_0 : i32, i32
  }
  func.func @transform_5(%arg0: i32, %arg1: i32) -> (i32, i32, i32) {
    %c0_i32 = arith.constant 0 : i32
    %c0_i32_0 = arith.constant 0 : i32
    return %arg0, %c0_i32, %arg1 : i32, i32, i32
  }
}

</mosaic_0001>

<llo_original>
// kernel: spdconv_pallas.1
$region0: #{spdconv_pallas.1}
  #allocation0 [shape = 'u32[]', space=smem, size = 0x4, offset = 0x4, fixed_abs, tag = 'smem constant byte address 0x4 - core index']
  #allocation1 [shape = 'u32[72,128]{1,0:T(1,128)}', space=vmem, size = 0x9000, scoped, tag = 'internal scratch']
  %s0 = inlined_call_operand.vmem [shape: bf16[2,16,64], index: 0, kind: input, shape index: {}]
  %s1 = inlined_call_operand.vmem [shape: bf16[2,1,32,8], index: 1, kind: input, shape index: {}]
  %s2 = inlined_call_operand.vmem [shape: bf16[3,24,16], index: 2, kind: input, shape index: {}]
  %s3 = inlined_call_operand.vmem [shape: f32[8,1], index: 3, kind: input, shape index: {}]
  %s4 = inlined_call_operand.vmem [shape: f32[2,64], index: 4, kind: input, shape index: {}]
  %s5 = inlined_call_operand.vmem [shape: f32[2,8,64], index: 5, kind: output, shape index: {}]
  %s6 = sld [smem:[#allocation0]]
  $region53: #{spdconv_pallas.1} parent=0
    _
  %s8 = ssub.s32 1, %s6
  %s9 = scalar_select 0, %s8, %s6
  loop: start=0, step=1, limit=4
  $region2: #{spdconv_pallas.1} parent=0 // loop_pre_header
    _
  $region3: #{spdconv_pallas.1} parent=0 // loop_header
    %s11 = sphi 0, %s15
    %p12 = scmp.ge.s32.totalorder %s11, 4
    %s18 = sphi 0, %s30
    %s19 = sphi 0, %s26
    %s20 = sphi 0, %s18
    %s21 = sphi 0, %s19
    %s22 = sphi 0, %s20
    %s23 = sphi 0, %s21
    %s35 = sphi 0, %s37
    %s38 = sphi 0, %s35
    %s39 = sphi 0, %s38
    %s55 = sphi 0, %s39
    %s63 = sphi 0, %s65
    %s66 = sphi 0, %s63
    %s67 = sphi 0, %s66
    %s83 = sphi 0, %s67
    %s87 = sphi 0, %s87
    %s89 = sphi 0, %s87
    %s90 = sphi 0, %s89
    %s104 = sphi 0, %s90
    %s108 = sphi 0, %s108
    %s110 = sphi 0, %s108
    %s111 = sphi 0, %s110
    %s125 = sphi 0, %s111
    %s129 = sphi 0, %s129
    %s131 = sphi 0, %s129
    %s132 = sphi 0, %s131
    %s146 = sphi 0, %s132
    %s154 = sphi 0, %s156
    %s157 = sphi 0, %s154
    %s158 = sphi 0, %s157
    %s174 = sphi 0, %s158
  $region4: #{spdconv_pallas.1} parent=0 // loop_header_branch
    %14 = sbr.rel (%p12) target = $region8
  $region5: #{spdconv_pallas.1} parent=0 // loop_body
    %s16 = ssub.s32 %s11, 1
    %s17 = ssub.s32 %s11, 2
    %s24 = sadd.s32 1, %s19
    %p25 = scmp.ge.s32.totalorder %s24, 1
    %s26 = scalar_select %p25, 0, %s24
    %s27 = sadd.s32 1, %s18
    %s28 = scalar_select %p25, %s27, %s18
    %p29 = scmp.ge.s32.totalorder %s28, 2
    %s30 = scalar_select %p29, 0, %s28
    %s31 = ssub.s32 %s18, %s30
    %s32 = ssub.s32 %s19, %s26
    %s33 = sor.u32 %s31, %s32
    %p34 = scmp.eq.s32.totalorder %s33, 0
    %s36 = sadd.s32 %s35, 1
    %s37 = scalar_select %p34, %s35, %s36
    %p40 = pneg %p34
    %p41 = scmp.eq.s32.totalorder %s11, 1
    %p42 = por %p40, %p41
    %p43 = scmp.ne.s32.totalorder %s35, %s38
    %p44 = scmp.eq.s32.totalorder %s11, 0
    %p45 = por %p43, %p44
    %p46 = scmp.ne.s32.totalorder %s35, %s38
    %p47 = scmp.eq.s32.totalorder %s16, 1
    %p48 = por %p46, %p47
    %p49 = scmp.ne.s32.totalorder %s38, %s39
    %p50 = scmp.eq.s32.totalorder %s16, 0
    %p51 = por %p49, %p50
    %p52 = scmp.ne.s32.totalorder %s38, %s39
    %p53 = scmp.eq.s32.totalorder %s17, 1
    %p54 = por %p52, %p53
    %p56 = scmp.ne.s32.totalorder %s39, %s55
    %p57 = scmp.eq.s32.totalorder %s17, 0
    %p58 = por %p56, %p57
    %s59 = ssub.s32 %s18, %s30
    %s60 = ssub.s32 %s19, %s26
    %s61 = sor.u32 %s59, %s60
    %p62 = scmp.eq.s32.totalorder %s61, 0
    %s64 = sadd.s32 %s63, 1
    %s65 = scalar_select %p62, %s63, %s64
    %p68 = pneg %p62
    %p69 = scmp.eq.s32.totalorder %s11, 1
    %p70 = por %p68, %p69
    %p71 = scmp.ne.s32.totalorder %s63, %s66
    %p72 = scmp.eq.s32.totalorder %s11, 0
    %p73 = por %p71, %p72
    %p74 = scmp.ne.s32.totalorder %s63, %s66
    %p75 = scmp.eq.s32.totalorder %s16, 1
    %p76 = por %p74, %p75
    %p77 = scmp.ne.s32.totalorder %s66, %s67
    %p78 = scmp.eq.s32.totalorder %s16, 0
    %p79 = por %p77, %p78
    %p80 = scmp.ne.s32.totalorder %s66, %s67
    %p81 = scmp.eq.s32.totalorder %s17, 1
    %p82 = por %p80, %p81
    %p84 = scmp.ne.s32.totalorder %s67, %s83
    %p85 = scmp.eq.s32.totalorder %s17, 0
    %p86 = por %p84, %p85
    %s88 = sadd.s32 %s87, 1
    %p91 = scmp.eq.s32.totalorder %s11, 1
    %p92 = scmp.ne.s32.totalorder %s87, %s89
    %p93 = scmp.eq.s32.totalorder %s11, 0
    %p94 = por %p92, %p93
    %p95 = scmp.ne.s32.totalorder %s87, %s89
    %p96 = scmp.eq.s32.totalorder %s16, 1
    %p97 = por %p95, %p96
    %p98 = scmp.ne.s32.totalorder %s89, %s90
    %p99 = scmp.eq.s32.totalorder %s16, 0
    %p100 = por %p98, %p99
    %p101 = scmp.ne.s32.totalorder %s89, %s90
    %p102 = scmp.eq.s32.totalorder %s17, 1
    %p103 = por %p101, %p102
    %p105 = scmp.ne.s32.totalorder %s90, %s104
    %p106 = scmp.eq.s32.totalorder %s17, 0
    %p107 = por %p105, %p106
    %s109 = sadd.s32 %s108, 1
    %p112 = scmp.eq.s32.totalorder %s11, 1
    %p113 = scmp.ne.s32.totalorder %s108, %s110
    %p114 = scmp.eq.s32.totalorder %s11, 0
    %p115 = por %p113, %p114
    %p116 = scmp.ne.s32.totalorder %s108, %s110
    %p117 = scmp.eq.s32.totalorder %s16, 1
    %p118 = por %p116, %p117
    %p119 = scmp.ne.s32.totalorder %s110, %s111
    %p120 = scmp.eq.s32.totalorder %s16, 0
    %p121 = por %p119, %p120
    %p122 = scmp.ne.s32.totalorder %s110, %s111
    %p123 = scmp.eq.s32.totalorder %s17, 1
    %p124 = por %p122, %p123
    %p126 = scmp.ne.s32.totalorder %s111, %s125
    %p127 = scmp.eq.s32.totalorder %s17, 0
    %p128 = por %p126, %p127
    %s130 = sadd.s32 %s129, 1
    %p133 = scmp.eq.s32.totalorder %s11, 1
    %p134 = scmp.ne.s32.totalorder %s129, %s131
    %p135 = scmp.eq.s32.totalorder %s11, 0
    %p136 = por %p134, %p135
    %p137 = scmp.ne.s32.totalorder %s129, %s131
    %p138 = scmp.eq.s32.totalorder %s16, 1
    %p139 = por %p137, %p138
    %p140 = scmp.ne.s32.totalorder %s131, %s132
    %p141 = scmp.eq.s32.totalorder %s16, 0
    %p142 = por %p140, %p141
    %p143 = scmp.ne.s32.totalorder %s131, %s132
    %p144 = scmp.eq.s32.totalorder %s17, 1
    %p145 = por %p143, %p144
    %p147 = scmp.ne.s32.totalorder %s132, %s146
    %p148 = scmp.eq.s32.totalorder %s17, 0
    %p149 = por %p147, %p148
    %s150 = ssub.s32 %s18, %s30
    %s151 = ssub.s32 %s19, %s26
    %s152 = sor.u32 %s150, %s151
    %p153 = scmp.eq.s32.totalorder %s152, 0
    %s155 = sadd.s32 %s154, 1
    %s156 = scalar_select %p153, %s154, %s155
    %p159 = pneg %p153
    %p160 = scmp.eq.s32.totalorder %s11, 1
    %p161 = por %p159, %p160
    %p162 = scmp.ne.s32.totalorder %s154, %s157
    %p163 = scmp.eq.s32.totalorder %s11, 0
    %p164 = por %p162, %p163
    %p165 = scmp.ne.s32.totalorder %s154, %s157
    %p166 = scmp.eq.s32.totalorder %s16, 1
    %p167 = por %p165, %p166
    %p168 = scmp.ne.s32.totalorder %s157, %s158
    %p169 = scmp.eq.s32.totalorder %s16, 0
    %p170 = por %p168, %p169
    %p171 = scmp.ne.s32.totalorder %s157, %s158
    %p172 = scmp.eq.s32.totalorder %s17, 1
    %p173 = por %p171, %p172
    %p175 = scmp.ne.s32.totalorder %s158, %s174
    %p176 = scmp.eq.s32.totalorder %s17, 0
    %p177 = por %p175, %p176
    %p178 = scmp.le.s32.totalorder 1, %s11
    %p179 = scmp.lt.s32.totalorder %s11, 3
    %p180 = pnand %p178, %p179
    %p181 = pneg %p180
    // Predicated region
    $region9: #{spdconv_pallas.1} parent=5 // pred_check
      _
    $region10: #{spdconv_pallas.1} parent=5 // pred_check_branch
      %183 = sbr.rel (%p180) target = $region12
    $region11: #{spdconv_pallas.1} parent=5 // pred_region
      %s184 = ssub.s32 %s11, 1
      // Predicated region
      $region13: #{spdconv_pallas.1} parent=11 // pred_check
        %p185 = pneg %p100
      $region14: #{spdconv_pallas.1} parent=11 // pred_check_branch
        %187 = sbr.rel (%p185) target = $region16
      $region15: #{spdconv_pallas.1} parent=11 // pred_region
        _
      $region16: #{spdconv_pallas.1} parent=11 // pred_fallthru
        _
      // Predicated region
      $region17: #{spdconv_pallas.1} parent=11 // pred_check
        %p188 = pneg %p121
      $region18: #{spdconv_pallas.1} parent=11 // pred_check_branch
        %190 = sbr.rel (%p188) target = $region20
      $region19: #{spdconv_pallas.1} parent=11 // pred_region
        _
      $region20: #{spdconv_pallas.1} parent=11 // pred_fallthru
        _
      // Predicated region
      $region21: #{spdconv_pallas.1} parent=11 // pred_check
        %p191 = pneg %p142
      $region22: #{spdconv_pallas.1} parent=11 // pred_check_branch
        %193 = sbr.rel (%p191) target = $region24
      $region23: #{spdconv_pallas.1} parent=11 // pred_region
        _
      $region24: #{spdconv_pallas.1} parent=11 // pred_fallthru
        _
    $region12: #{spdconv_pallas.1} parent=5 // pred_fallthru
      _
    %p194 = scmp.lt.s32.totalorder %s11, 2
    // Predicated region
    $region25: #{spdconv_pallas.1} parent=5 // pred_check
      %p195 = pneg %p194
    $region26: #{spdconv_pallas.1} parent=5 // pred_check_branch
      %197 = sbr.rel (%p195) target = $region28
    $region27: #{spdconv_pallas.1} parent=5 // pred_region
      // Predicated region
      $region29: #{spdconv_pallas.1} parent=27 // pred_check
        %p198 = pneg %p45
      $region30: #{spdconv_pallas.1} parent=27 // pred_check_branch
        %200 = sbr.rel (%p198) target = $region32
      $region31: #{spdconv_pallas.1} parent=27 // pred_region
        %p201 = scmp.lt.s32.totalorder %s18, 1
        %s202 = scalar_select %p201, %s18, 1
        %p203 = scmp.lt.s32.totalorder %s19, 0
        %s204 = scalar_select %p203, %s19, 0
        %s205 = smul.addr %s202, 2
        %s206 = sadd.s32 %s204, %s205
        %s207 = smul.addr %s206, 4
        %s208 = scalar_lea.vmem %s0, %s207
      $region32: #{spdconv_pallas.1} parent=27 // pred_fallthru
        _
      // Predicated region
      $region33: #{spdconv_pallas.1} parent=27 // pred_check
        %p209 = pneg %p73
      $region34: #{spdconv_pallas.1} parent=27 // pred_check_branch
        %211 = sbr.rel (%p209) target = $region36
      $region35: #{spdconv_pallas.1} parent=27 // pred_region
        %p212 = scmp.lt.s32.totalorder %s18, 1
        %s213 = scalar_select %p212, %s18, 1
        %p214 = scmp.lt.s32.totalorder %s19, 0
        %s215 = scalar_select %p214, %s19, 0
        %s216 = smul.addr %s215, 4
        %s217 = smul.addr %s213, 4
        %s218 = sadd.s32 %s216, %s217
        %s219 = smul.addr %s218, 4
        %s220 = scalar_lea.vmem %s1, %s219
      $region36: #{spdconv_pallas.1} parent=27 // pred_fallthru
        _
    $region28: #{spdconv_pallas.1} parent=5 // pred_fallthru
      _
    %p221 = scmp.le.s32.totalorder 1, %s11
    %p222 = scmp.lt.s32.totalorder %s11, 3
    %p223 = pnand %p221, %p222
    %p224 = pneg %p223
    // Predicated region
    $region37: #{spdconv_pallas.1} parent=5 // pred_check
      _
    $region38: #{spdconv_pallas.1} parent=5 // pred_check_branch
      %226 = sbr.rel (%p223) target = $region40
    $region39: #{spdconv_pallas.1} parent=5 // pred_region
      %s227 = ssub.s32 %s11, 1
      %p228 = scmp.lt.s32.totalorder %s20, 1
      %s229 = scalar_select %p228, %s20, 1
      %p230 = scmp.lt.s32.totalorder %s21, 0
      %s231 = scalar_select %p230, %s21, 0
      %s232 = smul.addr %s229, 2
      %s233 = sadd.s32 %s231, %s232
      %s234 = smul.addr %s233, 4
      %s235 = scalar_lea.vmem %s0, %s234
      %p236 = pneg %p51
      %p237 = pneg %p48
      %p238 = scmp.lt.s32.totalorder %s20, 1
      %s239 = scalar_select %p238, %s20, 1
      %p240 = scmp.lt.s32.totalorder %s21, 0
      %s241 = scalar_select %p240, %s21, 0
      %s242 = smul.addr %s241, 4
      %s243 = smul.addr %s239, 4
      %s244 = sadd.s32 %s242, %s243
      %s245 = smul.addr %s244, 4
      %s246 = scalar_lea.vmem %s1, %s245
      %p247 = pneg %p79
      %p248 = pneg %p76
      %p249 = pneg %p100
      %p250 = pneg %p97
      %p251 = pneg %p121
      %p252 = pneg %p118
      %p253 = pneg %p142
      %p254 = pneg %p139
      %p255 = pneg %p170
      %p256 = pneg %p167
      %p257 = scmp.lt.s32.totalorder %s20, 1
      %s258 = scalar_select %p257, %s20, 1
      %p259 = scmp.lt.s32.totalorder %s21, 0
      %s260 = scalar_select %p259, %s21, 0
      %s261 = sadd.s32 %s260, %s258
      %s262 = smul.addr %s261, 8
      %s263 = scalar_lea.vmem %s5, %s262
      %p264 = scmp.lt.s32.totalorder %s20, 1
      %s265 = scalar_select %p264, %s20, 1
      %p266 = scmp.lt.s32.totalorder %s21, 0
      %s267 = scalar_select %p266, %s21, 0
      %s268 = smul.addr %s265, 2
      %s269 = sadd.s32 %s267, %s268
      %s270 = smul.addr %s269, 4
      %s271 = scalar_lea.vmem %s0, %s270
      %p272 = scmp.lt.s32.totalorder %s20, 1
      %s273 = scalar_select %p272, %s20, 1
      %p274 = scmp.lt.s32.totalorder %s21, 0
      %s275 = scalar_select %p274, %s21, 0
      %s276 = smul.addr %s275, 4
      %s277 = smul.addr %s273, 4
      %s278 = sadd.s32 %s276, %s277
      %s279 = smul.addr %s278, 4
      %s280 = scalar_lea.vmem %s1, %s279
      %p281 = scmp.lt.s32.totalorder %s20, 1
      %s282 = scalar_select %p281, %s20, 1
      %p283 = scmp.lt.s32.totalorder %s21, 0
      %s284 = scalar_select %p283, %s21, 0
      %s285 = sadd.s32 %s284, %s282
      %s286 = smul.addr %s285, 8
      %s287 = scalar_lea.vmem %s5, %s286
      %v289 = vld [vmem:[%s271] sm:$0xf]
      %v290 = vld [vmem:[%s271 + $0x4] sm:$0xf]
      %v291 = vld [vmem:[%s280] sm:$0xf]
      %v292 = vld [vmem:[%s280 + $0x4] sm:$0xf]
      %v293 = vld [vmem:[%s280 + $0x8] sm:$0xf]
      %v294 = vld [vmem:[%s280 + $0xc] sm:$0xf]
      %v297 = vunpack.c.l.b16 %v291
      %v298 = vunpack.c.l.b16 %v292
      %v299 = vpack.c.b16 %v298, %v297
      %v302 = vunpack.c.l.b16 %v289
      %v303 = vunpack.c.l.b16 %v290
      %v304 = vpack.c.b16 %v303, %v302
      %305 = vrot.lane.b32.xlu0 %v304, 8
      %v306 = vpop.permute.xlu0 %305
      %vm307 = vcmask 64512
      %v310 = vsel %vm307, %v299, %v306
      %312 = vrot.lane.b32.xlu0 %v304, 120
      %v313 = vpop.permute.xlu0 %312
      %v316 = vunpack.c.l.b16 %v293
      %v317 = vunpack.c.l.b16 %v294
      %v318 = vpack.c.b16 %v317, %v316
      %319 = vrot.lane.b32.xlu0 %v318, 56
      %v320 = vpop.permute.xlu0 %319
      %vm321 = vcmask 457728
      %v324 = vsel %vm321, %v313, %v320
      %s326 = scalar_lea.vmem %s2, 12
      %v327 = vld [vmem:[%s326] sm:$0xf]
      %v328 = vld [vmem:[%s326 + $0x4] sm:$0xf]
      %v329 = vld [vmem:[%s326 + $0x8] sm:$0xf]
      %v330 = vld [vmem:[%s2] sm:$0xf]
      %v331 = vld [vmem:[%s2 + $0x4] sm:$0xf]
      %v332 = vld [vmem:[%s2 + $0x8] sm:$0xf]
      %v336 = vunpack.c.l.b16 %v330
      %v337 = vunpack.c.l.b16 %v331
      %v338 = vunpack.c.l.b16 %v332
      %v339 = vpack.c.b16 %v337, %v336
      %v340 = vpack.c.b16 %v338, %v338
      %vm341 = vcmask 130048
      %v343 = vsel %vm341, %v339, 0
      %v346 = vsel %vm341, %v340, 0
      %348 = vmatpush.bf16.msra.mxu0 0
      %349 = vmatpush.bf16.msra.mxu0 0
      %350 = vmatpush.bf16.msra.mxu0 0
      %351 = vmatpush.bf16.msra.mxu0 0
      %352 = vmatpush.bf16.msra.mxu0 0
      %353 = vmatpush.bf16.msra.mxu0 0
      %354 = vmatpush.bf16.msra.mxu0 0
      %355 = vmatpush.bf16.msra.mxu0 %v310
      %356 = vmatmul.bf16.gmra.mxu0 %v343
      %v357 = vpop.f32.mrf.mxu0
      %v358 = vadd.f32 0.0, %v357
      %v359 = vpop.f32.mrf.mxu0
      %v360 = vadd.f32 0.0, %v359
      %361 = vmatmul.bf16.gmra.mxu0 %v346
      %v362 = vpop.f32.mrf.mxu0
      %v363 = vadd.f32 0.0, %v362
      %v364 = vpop.f32.mrf.mxu0
      %365 = vdwg.mxu0
      %v369 = vunpack.c.l.b16 %v327
      %v370 = vunpack.c.l.b16 %v328
      %v371 = vunpack.c.l.b16 %v329
      %v372 = vpack.c.b16 %v370, %v369
      %v373 = vpack.c.b16 %v371, %v371
      %v376 = vsel %vm341, %v372, 0
      %v379 = vsel %vm341, %v373, 0
      %381 = vmatpush.bf16.msra.mxu0 0
      %382 = vmatpush.bf16.msra.mxu0 0
      %383 = vmatpush.bf16.msra.mxu0 0
      %384 = vmatpush.bf16.msra.mxu0 0
      %385 = vmatpush.bf16.msra.mxu0 0
      %386 = vmatpush.bf16.msra.mxu0 0
      %387 = vmatpush.bf16.msra.mxu0 0
      %388 = vmatpush.bf16.msra.mxu0 %v304
      %389 = vmatmul.bf16.gmra.mxu0 %v376
      %v390 = vpop.f32.mrf.mxu0
      %v391 = vadd.f32 %v358, %v390
      %v392 = vpop.f32.mrf.mxu0
      %v393 = vadd.f32 %v360, %v392
      %394 = vmatmul.bf16.gmra.mxu0 %v379
      %v395 = vpop.f32.mrf.mxu0
      %v396 = vadd.f32 %v363, %v395
      %v397 = vpop.f32.mrf.mxu0
      %398 = vdwg.mxu0
      %s399 = scalar_lea.vmem %s2, 24
      %v400 = vld [vmem:[%s399] sm:$0xf]
      %v401 = vld [vmem:[%s399 + $0x4] sm:$0xf]
      %v402 = vld [vmem:[%s399 + $0x8] sm:$0xf]
      %v406 = vunpack.c.l.b16 %v400
      %v407 = vunpack.c.l.b16 %v401
      %v408 = vunpack.c.l.b16 %v402
      %v409 = vpack.c.b16 %v407, %v406
      %v410 = vpack.c.b16 %v408, %v408
      %v412 = vsel %vm341, %v409, 0
      %v415 = vsel %vm341, %v410, 0
      %417 = vmatpush.bf16.msra.mxu0 0
      %418 = vmatpush.bf16.msra.mxu0 0
      %419 = vmatpush.bf16.msra.mxu0 0
      %420 = vmatpush.bf16.msra.mxu0 0
      %421 = vmatpush.bf16.msra.mxu0 0
      %422 = vmatpush.bf16.msra.mxu0 0
      %423 = vmatpush.bf16.msra.mxu0 0
      %424 = vmatpush.bf16.msra.mxu0 %v324
      %425 = vmatmul.bf16.gmra.mxu0 %v412
      %v426 = vpop.f32.mrf.mxu0
      %v427 = vadd.f32 0.0, %v426
      %v428 = vpop.f32.mrf.mxu0
      %v429 = vadd.f32 0.0, %v428
      %430 = vmatmul.bf16.gmra.mxu0 %v415
      %v431 = vpop.f32.mrf.mxu0
      %v432 = vadd.f32 0.0, %v431
      %v433 = vpop.f32.mrf.mxu0
      %434 = vdwg.mxu0
      %v435 = vadd.f32 %v391, %v427
      %v436 = vadd.f32 %v393, %v429
      %v437 = vadd.f32 %v396, %v432
      %439 = vrot.lane.b32.xlu0 %v435, 65
      %v440 = vpop.permute.xlu0 %439
      %442 = vrot.lane.b32.xlu0 %v435, 1
      %v443 = vpop.permute.xlu0 %442
      %vm445 = vcmask 7168
      %v446 = vsel %vm445, %v440, %v443
      %448 = vrot.lane.b32.xlu0 %v437, 127
      %v449 = vpop.permute.xlu0 %448
      %451 = vrot.lane.b32.xlu0 %v437, 63
      %v452 = vpop.permute.xlu0 %451
      %vm454 = vcmask 515072
      %v455 = vsel %vm454, %v449, %v452
      %v456 = vld [vmem:[%s4] sm:$0x1]
      %v457 = vperm.slane %v456, 0
      %v458 = vmul.f32 %v446, %v457
      %v459 = vadd.f32 %v436, %v458
      %v460 = vld [vmem:[%s4 + $0x1] sm:$0x1]
      %v461 = vperm.slane %v460, 0
      %v462 = vmul.f32 %v455, %v461
      %v463 = vadd.f32 %v459, %v462
      %v464 = vld [vmem:[%s3] sm:$0xff]
      %466 = vset.pattern.permute.xlu0 0
      %467 = vperm.xlu0 %466, %v464
      %v468 = vpop.permute.xlu0 %467
      %v470 = vadd.f32 %v463, %v468
      %v471 = vxor.u32 %v470, 2147483648
      %v472 = vmul.f32 %v471, 1.442695
      %v473 = vpow.pop %v472
      %v474 = vadd.f32 %v473, 1.0
      %v475 = vrcp.pop %v474
      %v476 = vmul.f32 %v474, %v475
      %v477 = vsub.f32 1.0, %v476
      %v478 = vmul.f32 %v475, %v477
      %v479 = vadd.f32 %v475, %v478
      %vm480 = vweird.f32 %v474
      %vm481 = vweird.f32 %v475
      %vm482 = vmor %vm480, %vm481
      %v483 = vsel %vm482, %v475, %v479
      %v484 = vand.u32 2147483647, %v474
      %vm485 = vcmp.eq.f32.partialorder %v484, 8.507059e+37
      %v486 = vand.u32 %v474, 2147483648
      %v487 = vor.u32 1.1754944e-38, %v486
      %v488 = vsel %vm485, %v487, %v483
      %v489 = vmul.f32 1.0, %v488
      %v490 = vmul.f32 %v470, %v489
      %vm491 = vcmask 523264
      %492 = vst.msk [vmem:[%s287] sm:$0xff] %vm491, %v490
      %p493 = scmp.lt.s32.totalorder %s20, 1
      %s494 = scalar_select %p493, %s20, 1
      %p495 = scmp.lt.s32.totalorder %s21, 0
      %s496 = scalar_select %p495, %s21, 0
      %s497 = sadd.s32 %s496, %s494
      %s498 = smul.addr %s497, 8
      %s499 = scalar_lea.vmem %s5, %s498
      // Predicated region
      $region41: #{spdconv_pallas.1} parent=39 // pred_check
        %p500 = pneg %p167
      $region42: #{spdconv_pallas.1} parent=39 // pred_check_branch
        %502 = sbr.rel (%p500) target = $region44
      $region43: #{spdconv_pallas.1} parent=39 // pred_region
        _
      $region44: #{spdconv_pallas.1} parent=39 // pred_fallthru
        _
    $region40: #{spdconv_pallas.1} parent=5 // pred_fallthru
      _
    %p503 = scmp.le.s32.totalorder 2, %s11
    // Predicated region
    $region45: #{spdconv_pallas.1} parent=5 // pred_check
      %p504 = pneg %p503
    $region46: #{spdconv_pallas.1} parent=5 // pred_check_branch
      %506 = sbr.rel (%p504) target = $region48
    $region47: #{spdconv_pallas.1} parent=5 // pred_region
      %s507 = ssub.s32 %s11, 2
      // Predicated region
      $region49: #{spdconv_pallas.1} parent=47 // pred_check
        %p508 = pneg %p173
      $region50: #{spdconv_pallas.1} parent=47 // pred_check_branch
        %510 = sbr.rel (%p508) target = $region52
      $region51: #{spdconv_pallas.1} parent=47 // pred_region
        %p511 = scmp.lt.s32.totalorder %s22, 1
        %s512 = scalar_select %p511, %s22, 1
        %p513 = scmp.lt.s32.totalorder %s23, 0
        %s514 = scalar_select %p513, %s23, 0
        %s515 = sadd.s32 %s514, %s512
        %s516 = smul.addr %s515, 8
        %s517 = scalar_lea.vmem %s5, %s516
      $region52: #{spdconv_pallas.1} parent=47 // pred_fallthru
        _
    $region48: #{spdconv_pallas.1} parent=5 // pred_fallthru
      _
  $region6: #{spdconv_pallas.1} parent=0 // loop_footer
    %s15 = sadd.s32 1, %s11
  $region7: #{spdconv_pallas.1} parent=0 // loop_footer_branch
    %10 = sbr.rel target = $region3
  $region8: #{spdconv_pallas.1} parent=0 // loop_exit
    _

</llo_original>
